<compile_context>
chip_gen: v6e
topology: v6e:2x2x1
jax: 0.10.0
libtpu: 0.0.40
codegen_flags: <defaults>
</compile_context>

<pallas_src>
import functools

import jax
import jax.numpy as jnp
from jax.experimental import pallas as pl
from jax.experimental.pallas import tpu as pltpu


# ----------------------------------------------------------------------------
# Small helpers
# ----------------------------------------------------------------------------
def _round_up(x: int, m: int) -> int:
    return (x + m - 1) // m * m


def _pad2(a, rows: int, cols: int):
    r, c = a.shape
    if r == rows and c == cols:
        return a
    return jnp.pad(a, ((0, rows - r), (0, cols - c)))


def _choose_tm(m_rows: int, d_in_p: int, d_out_p: int,
               bytes_per_elem: int = 4, budget: int = 8 * 1024 * 1024) -> int:
    """Pick a row-tile size whose double-buffered in/out tiles fit `budget`."""
    if m_rows <= 1024:
        return _round_up(m_rows, 8)
    per_row = 2 * (d_in_p + d_out_p) * bytes_per_elem  # double-buffered x + out
    tm = max(8, budget // max(per_row, 1))
    tm = min(tm, 1024)
    tm = max(8, (tm // 8) * 8)
    return tm


def _compiler_params():
    return pltpu.CompilerParams(
        dimension_semantics=("parallel",),          # shard M across TCs (v7x)
        vmem_limit_bytes=32 * 1024 * 1024,          # safe on v5e/v6e/v7x
    )


# ----------------------------------------------------------------------------
# Kernels
# ----------------------------------------------------------------------------
def _ln_rows_f32(x_ref, g_ref, b_ref, *, eps: float, d_valid: int):
    """Shared LN body: returns the normalized+affine tile in f32."""
    x = x_ref[...].astype(jnp.float32)               # (TM, Dp)
    d_pad = x.shape[-1]
    masked = d_pad != d_valid
    if masked:
        mask = jax.lax.broadcasted_iota(jnp.int32, x.shape, 1) < d_valid
        x = jnp.where(mask, x, 0.0)
    mean = jnp.sum(x, axis=-1, keepdims=True) * (1.0 / d_valid)
    centered = x - mean
    if masked:
        centered = jnp.where(mask, centered, 0.0)
    var = jnp.sum(centered * centered, axis=-1, keepdims=True) * (1.0 / d_valid)
    inv = jax.lax.rsqrt(var + eps)                   # EUP
    # Fold gamma into the per-row scale: one multiply-add epilogue.
    scale = inv * g_ref[...].astype(jnp.float32)     # (TM,1)*(1,Dp) -> (TM,Dp)
    return centered * scale + b_ref[...].astype(jnp.float32)


def _layernorm_kernel(x_ref, g_ref, b_ref, o_ref, *, eps: float, d_valid: int):
    """Standalone tiled LayerNorm. x:(TM,Dp) g,b:(1,Dp) o:(TM,Dp)."""
    ln = _ln_rows_f32(x_ref, g_ref, b_ref, eps=eps, d_valid=d_valid)
    o_ref[...] = ln.astype(o_ref.dtype)


def _prenorm_linear_kernel(x_ref, g_ref, b_ref, w_ref, bias_ref, o_ref,
                           *, eps: float, d_valid: int):
    """Fused LayerNorm + Linear: o = LN(x) @ W + bias, all in VMEM."""
    ln = _ln_rows_f32(x_ref, g_ref, b_ref, eps=eps, d_valid=d_valid)
    acc = jnp.dot(ln.astype(w_ref.dtype), w_ref[...],
                  preferred_element_type=jnp.float32)
    o_ref[...] = (acc + bias_ref[...].astype(jnp.float32)).astype(o_ref.dtype)


# ----------------------------------------------------------------------------
# Wrappers
# ----------------------------------------------------------------------------
def layer_norm(x, gamma, beta, eps: float = 1e-5):
    """LayerNorm over the last dim of x (any leading shape), tiled over rows."""
    orig_shape = x.shape
    D = orig_shape[-1]
    x2 = x.reshape(-1, D)
    M = x2.shape[0]

    Dp = _round_up(D, 128)
    TM = _choose_tm(M, Dp, Dp)
    Mp = _round_up(M, TM)

    x_p = _pad2(x2, Mp, Dp)
    g_p = _pad2(gamma.reshape(1, D), 1, Dp)
    b_p = _pad2(beta.reshape(1, D), 1, Dp)

    out = pl.pallas_call(
        functools.partial(_layernorm_kernel, eps=eps, d_valid=D),
        out_shape=jax.ShapeDtypeStruct((Mp, Dp), x.dtype),
        grid=(Mp // TM,),
        in_specs=[
            pl.BlockSpec((TM, Dp), lambda i: (i, 0)),
            pl.BlockSpec((1, Dp), lambda i: (0, 0)),   # resident
            pl.BlockSpec((1, Dp), lambda i: (0, 0)),   # resident
        ],
        out_specs=pl.BlockSpec((TM, Dp), lambda i: (i, 0)),
        compiler_params=_compiler_params(),
    )(x_p, g_p, b_p)

    return out[:M, :D].reshape(orig_shape)


def prenorm_linear(x, gamma, beta, w, bias, eps: float = 1e-5):
    """Fused LN(x) @ W + bias in a single tiled pallas_call."""
    orig_shape = x.shape
    D = orig_shape[-1]
    D_out = w.shape[-1]
    x2 = x.reshape(-1, D)
    M = x2.shape[0]

    Dp = _round_up(D, 128)
    Dop = _round_up(D_out, 128)
    TM = _choose_tm(M, Dp, Dop)
    Mp = _round_up(M, TM)

    x_p = _pad2(x2, Mp, Dp)
    g_p = _pad2(gamma.reshape(1, D), 1, Dp)
    b_p = _pad2(beta.reshape(1, D), 1, Dp)
    w_p = _pad2(w, Dp, Dop)
    bias_p = _pad2(bias.reshape(1, D_out), 1, Dop)

    # TODO(synk): if Dp*Dop*4B no longer fits VMEM beside the tiles, add K/N
    # grid axes with an f32 accumulator scratch (reduction axis last).
    out = pl.pallas_call(
        functools.partial(_prenorm_linear_kernel, eps=eps, d_valid=D),
        out_shape=jax.ShapeDtypeStruct((Mp, Dop), x.dtype),
        grid=(Mp // TM,),
        in_specs=[
            pl.BlockSpec((TM, Dp), lambda i: (i, 0)),
            pl.BlockSpec((1, Dp), lambda i: (0, 0)),    # gamma, resident
            pl.BlockSpec((1, Dp), lambda i: (0, 0)),    # beta, resident
            pl.BlockSpec((Dp, Dop), lambda i: (0, 0)),  # W, resident
            pl.BlockSpec((1, Dop), lambda i: (0, 0)),   # bias, resident
        ],
        out_specs=pl.BlockSpec((TM, Dop), lambda i: (i, 0)),
        compiler_params=_compiler_params(),
    )(x_p, g_p, b_p, w_p, bias_p)

    return out[:M, :D_out].reshape(orig_shape[:-1] + (D_out,))


def pre_norm(norm_params, fn, x, y=None, eps: float = 1e-5, **kwargs):
    """Generic PreNorm.forward:
         fn(norm(x), **kwargs)           if y is None
         fn(norm(x), norm(y), **kwargs)  otherwise
       (`fn` is arbitrary user code; only the LayerNorm runs in Pallas here.)"""
    gamma, beta = norm_params
    if y is None:
        return fn(layer_norm(x, gamma, beta, eps), **kwargs)
    # Run both LayerNorms as ONE gridded pallas_call by stacking along rows.
    D = x.shape[-1]
    xf = x.reshape(-1, D)
    yf = y.reshape(-1, D)
    stacked = jnp.concatenate([xf, yf], axis=0)
    n = layer_norm(stacked, gamma, beta, eps)
    nx = n[: xf.shape[0]].reshape(x.shape)
    ny = n[xf.shape[0]:].reshape(y.shape)
    return fn(nx, ny, **kwargs)


def pre_norm_linear(norm_params, w, bias, x, y=None, eps: float = 1e-5):
    """Fused PreNorm specialized to fn = Linear(W, bias).
       Returns linear(LN(x)) if y is None, else (linear(LN(x)), linear(LN(y)))
       computed in a single fused pallas_call (W stays resident in VMEM)."""
    gamma, beta = norm_params
    if y is None:
        return prenorm_linear(x, gamma, beta, w, bias, eps)
    D = x.shape[-1]
    D_out = w.shape[-1]
    xf = x.reshape(-1, D)
    yf = y.reshape(-1, D)
    stacked = jnp.concatenate([xf, yf], axis=0)
    out = prenorm_linear(stacked, gamma, beta, w, bias, eps)
    ox = out[: xf.shape[0]].reshape(x.shape[:-1] + (D_out,))
    oy = out[xf.shape[0]:].reshape(y.shape[:-1] + (D_out,))
    return ox, oy


# ----------------------------------------------------------------------------
# Demo
# ----------------------------------------------------------------------------
if __name__ == "__main__":
    B, N, D = 2, 8, 32
    key = jax.random.PRNGKey(0)
    kx, ky, kw, kg, kb = jax.random.split(key, 5)

    x = jax.random.normal(kx, (B, N, D), dtype=jnp.float32)
    y = jax.random.normal(ky, (B, N, D), dtype=jnp.float32)

    # LayerNorm params (perturbed from default init to actually test the affine)
    gamma = 1.0 + 0.1 * jax.random.normal(kg, (D,), dtype=jnp.float32)
    beta = 0.1 * jax.random.normal(kb, (D,), dtype=jnp.float32)

    # Example `fn`: Linear(D, D).  (PreNorm's fn is arbitrary / user supplied.)
    W = jax.random.normal(kw, (D, D), dtype=jnp.float32) * 0.05
    bvec = jnp.zeros((D,), dtype=jnp.float32)

    # --- 1) generic pre_norm with an arbitrary JAX fn (y is None path) -------
    out_generic = pre_norm((gamma, beta), lambda a: a @ W + bvec, x)

    # --- 2) fused LN+Linear (y is None path) ---------------------------------
    out1 = pre_norm_linear((gamma, beta), W, bvec, x)

    # --- 3) fused LN+Linear, y provided (fn_pair = linear(a) + linear(b)) ----
    ox, oy = pre_norm_linear((gamma, beta), W, bvec, x, y)
    out2 = ox + oy

    jax.block_until_ready((out_generic, out1, out2))

    # Reference in plain JAX
    def ref_ln(a):
        mu = a.mean(-1, keepdims=True)
        var = ((a - mu) ** 2).mean(-1, keepdims=True)
        return (a - mu) / jnp.sqrt(var + 1e-5) * gamma + beta

    ref1 = ref_ln(x) @ W + bvec
    ref2 = (ref_ln(x) @ W + bvec) + (ref_ln(y) @ W + bvec)

    assert jnp.allclose(out_generic, ref1, atol=1e-3, rtol=1e-3)
    assert jnp.allclose(out1, ref1, atol=1e-3, rtol=1e-3)
    assert jnp.allclose(out2, ref2, atol=1e-3, rtol=1e-3)

    print("KERNEL_OK")
</pallas_src>

<mosaic_0001>
module attributes {stable_mosaic.version = 11 : i64} {
  func.func @_layernorm_kernel(%arg0: i32, %arg1: memref<16x128xf32, #tpu.memory_space<vmem>>, %arg2: memref<1x128xf32, #tpu.memory_space<vmem>>, %arg3: memref<1x128xf32, #tpu.memory_space<vmem>>, %arg4: memref<16x128xf32, #tpu.memory_space<vmem>>) attributes {dimension_semantics = [#tpu.dimension_semantics<parallel>], iteration_bounds = array<i64: 1>, scalar_prefetch = 0 : i64, scratch_operands = 0 : i64, tpu.core_type = #tpu.core_type<tc>, window_params = [{transform_indices = @transform_0, window_bounds = array<i64: 16, 128>}, {pipeline_mode = #tpu.pipeline_mode<synchronous>, transform_indices = @transform_1, window_bounds = array<i64: 1, 128>}, {pipeline_mode = #tpu.pipeline_mode<synchronous>, transform_indices = @transform_2, window_bounds = array<i64: 1, 128>}, {transform_indices = @transform_3, window_bounds = array<i64: 16, 128>}]} {
    %c0 = arith.constant 0 : index
    %c0_0 = arith.constant 0 : index
    %0 = vector.load %arg1[%c0, %c0_0] : memref<16x128xf32, #tpu.memory_space<vmem>>, vector<16x128xf32>
    %1 = tpu.iota {dimensions = array<i32: 1>} : vector<16x128xi32>
    %c32_i32 = arith.constant 32 : i32
    %2 = vector.broadcast %c32_i32 : i32 to vector<16x128xi32>
    %3 = arith.cmpi slt, %1, %2 : vector<16x128xi32>
    %cst = arith.constant 0.000000e+00 : f32
    %4 = vector.broadcast %cst : f32 to vector<16x128xf32>
    %5 = arith.select %3, %0, %4 : vector<16x128xi1>, vector<16x128xf32>
    %cst_1 = arith.constant dense<0.000000e+00> : vector<16xf32>
    %6 = vector.multi_reduction <add>, %5, %cst_1 [1] : vector<16x128xf32> to vector<16xf32>
    %7 = vector.shape_cast %6 : vector<16xf32> to vector<16x1xf32>
    %cst_2 = arith.constant 3.125000e-02 : f32
    %8 = vector.broadcast %cst_2 : f32 to vector<16x1xf32>
    %9 = arith.mulf %7, %8 : vector<16x1xf32>
    %10 = vector.broadcast %9 : vector<16x1xf32> to vector<16x128xf32>
    %11 = arith.subf %5, %10 : vector<16x128xf32>
    %cst_3 = arith.constant 0.000000e+00 : f32
    %12 = vector.broadcast %cst_3 : f32 to vector<16x128xf32>
    %13 = arith.select %3, %11, %12 : vector<16x128xi1>, vector<16x128xf32>
    %14 = arith.mulf %13, %13 : vector<16x128xf32>
    %cst_4 = arith.constant dense<0.000000e+00> : vector<16xf32>
    %15 = vector.multi_reduction <add>, %14, %cst_4 [1] : vector<16x128xf32> to vector<16xf32>
    %16 = vector.shape_cast %15 : vector<16xf32> to vector<16x1xf32>
    %cst_5 = arith.constant 3.125000e-02 : f32
    %17 = vector.broadcast %cst_5 : f32 to vector<16x1xf32>
    %18 = arith.mulf %16, %17 : vector<16x1xf32>
    %cst_6 = arith.constant 9.99999974E-6 : f32
    %19 = vector.broadcast %cst_6 : f32 to vector<16x1xf32>
    %20 = arith.addf %18, %19 : vector<16x1xf32>
    %21 = math.rsqrt %20 : vector<16x1xf32>
    %c0_7 = arith.constant 0 : index
    %c0_8 = arith.constant 0 : index
    %22 = vector.load %arg2[%c0_7, %c0_8] : memref<1x128xf32, #tpu.memory_space<vmem>>, vector<1x128xf32>
    %23 = vector.broadcast %21 : vector<16x1xf32> to vector<16x128xf32>
    %24 = vector.broadcast %22 : vector<1x128xf32> to vector<16x128xf32>
    %25 = arith.mulf %23, %24 : vector<16x128xf32>
    %26 = arith.mulf %13, %25 : vector<16x128xf32>
    %c0_9 = arith.constant 0 : index
    %c0_10 = arith.constant 0 : index
    %27 = vector.load %arg3[%c0_9, %c0_10] : memref<1x128xf32, #tpu.memory_space<vmem>>, vector<1x128xf32>
    %28 = vector.broadcast %27 : vector<1x128xf32> to vector<16x128xf32>
    %29 = arith.addf %26, %28 : vector<16x128xf32>
    %c0_11 = arith.constant 0 : index
    %c0_12 = arith.constant 0 : index
    %30 = vector.load %arg4[%c0_11, %c0_12] : memref<16x128xf32, #tpu.memory_space<vmem>>, vector<16x128xf32>
    tpu.vector_store %arg4[%c0_11, %c0_12], %29 {strides = array<i32>} : memref<16x128xf32, #tpu.memory_space<vmem>>, vector<16x128xf32>,
    return
  }
  func.func @transform_0(%arg0: i32) -> (i32, i32) {
    %c0_i32 = arith.constant 0 : i32
    %c0_i32_0 = arith.constant 0 : i32
    return %arg0, %c0_i32 : i32, i32
  }
  func.func @transform_1(%arg0: i32) -> (i32, i32) {
    %c0_i32 = arith.constant 0 : i32
    %c0_i32_0 = arith.constant 0 : i32
    %c0_i32_1 = arith.constant 0 : i32
    return %c0_i32, %c0_i32_0 : i32, i32
  }
  func.func @transform_2(%arg0: i32) -> (i32, i32) {
    %c0_i32 = arith.constant 0 : i32
    %c0_i32_0 = arith.constant 0 : i32
    %c0_i32_1 = arith.constant 0 : i32
    return %c0_i32, %c0_i32_0 : i32, i32
  }
  func.func @transform_3(%arg0: i32) -> (i32, i32) {
    %c0_i32 = arith.constant 0 : i32
    %c0_i32_0 = arith.constant 0 : i32
    return %arg0, %c0_i32 : i32, i32
  }
}

</mosaic_0001>

<llo_original>
// kernel: tpu_custom_call.1
$region0: #{tpu_custom_call.1}
  #allocation0 [shape = 'u32[]', space=smem, size = 0x4, offset = 0x4, fixed_abs, tag = 'smem constant byte address 0x4 - core index']
  #allocation1 [shape = 'u32[144,128]{1,0:T(1,128)}', space=vmem, size = 0x12000, scoped, tag = 'internal scratch']
  %s0 = inlined_call_operand.hbm [shape: f32[16,128], index: 0, kind: input, shape index: {}]
  %s1 = inlined_call_operand.vmem [shape: f32[1,128], index: 1, kind: input, shape index: {}]
  %s2 = inlined_call_operand.vmem [shape: f32[1,128], index: 2, kind: input, shape index: {}]
  %s3 = inlined_call_operand.hbm [shape: f32[16,128], index: 3, kind: output, shape index: {}]
  %s4 = sld [smem:[#allocation0]]
  $region26: #{tpu_custom_call.1} parent=0
    _
  %s6 = ssub.s32 1, %s4
  %s7 = scalar_select 0, %s6, %s4
  $region1: #{tpu_custom_call.1} parent=0
    #allocation2 [shape = 'u8[8192]{0}', space=vmem, size = 0x2000, scoped, tag = 'input window, operand 0, single buffered']
    #allocation3 [shape = 's32[1]{0}', space=sflag, size = 0x4, scoped, tag = 'scoped memory for tpu_custom_call.1']
    #allocation4 [shape = 's32[1]{0}', space=sflag, size = 0x4, scoped, tag = 'scoped memory for tpu_custom_call.1']
    #allocation5 [shape = 'u8[8192]{0}', space=vmem, size = 0x2000, scoped, tag = 'output window, operand 0, single buffered']
    %8 = vsyncpa [#allocation3], 0
    %9 = vsyncpa [#allocation4], 0
    // Predicated region
    $region2: #{tpu_custom_call.1} parent=1 // pred_check
      _
    $region3: #{tpu_custom_call.1} parent=1 // pred_check_branch
      %11 = sbr.rel (0) target = $region5
    $region4: #{tpu_custom_call.1} parent=1 // pred_region
      %s13 = ssub.s32 256, 256
      %14 = vsyncadd [#allocation3], %s13
      %s15 = sshll.u32 [#allocation2], 4
      %s16 = int_to_ptr.vmem [resolvable:$true] %s15
      %21 = dma.hbm_to_vmem [thread:$0]  %s0, 256, %s16, [#allocation3], 128, 128, 8
    $region5: #{tpu_custom_call.1} parent=1 // pred_fallthru
      _
    // Predicated region
    $region6: #{tpu_custom_call.1} parent=1 // pred_check
      _
    $region7: #{tpu_custom_call.1} parent=1 // pred_check_branch
      %23 = sbr.rel (0) target = $region9
    $region8: #{tpu_custom_call.1} parent=1 // pred_region
      _
    $region9: #{tpu_custom_call.1} parent=1 // pred_fallthru
      _
    // Predicated region
    $region10: #{tpu_custom_call.1} parent=1 // pred_check
      _
    $region11: #{tpu_custom_call.1} parent=1 // pred_check_branch
      %25 = sbr.rel (0) target = $region13
    $region12: #{tpu_custom_call.1} parent=1 // pred_region
      _
    $region13: #{tpu_custom_call.1} parent=1 // pred_fallthru
      _
    // Predicated region
    $region14: #{tpu_custom_call.1} parent=1 // pred_check
      _
    $region15: #{tpu_custom_call.1} parent=1 // pred_check_branch
      %27 = sbr.rel (0) target = $region17
    $region16: #{tpu_custom_call.1} parent=1 // pred_region
      %28 = dma.done [#allocation3], 256
    $region17: #{tpu_custom_call.1} parent=1 // pred_fallthru
      _
    %v29 = vld [vmem:[#allocation2] sm:$0xff]
    %v30 = vld [vmem:[#allocation2 + $0x8] sm:$0xff]
    %v31 = vlaneseq
    %v32 = vand.u32 %v31, 127
    %vm33 = vcmp.lt.s32.totalorder %v32, 32
    %v34 = vsel %vm33, %v29, 0.0
    %v35 = vsel %vm33, %v30, 0.0
    %36 = vadd.xlane.f32.xlu0 %v34
    %v37 = vpop.xlane.xlu0 %36
    %38 = vadd.xlane.f32.xlu0 %v35
    %v39 = vpop.xlane.xlu0 %38
    %v40 = vmul.f32 %v37, 0.03125
    %v41 = vmul.f32 %v39, 0.03125
    %v42 = vsub.f32 %v34, %v40
    %v43 = vsub.f32 %v35, %v41
    %v44 = vsel %vm33, %v42, 0.0
    %v45 = vsel %vm33, %v43, 0.0
    %v46 = vmul.f32 %v44, %v44
    %v47 = vmul.f32 %v45, %v45
    %48 = vadd.xlane.f32.xlu0 %v46
    %v49 = vpop.xlane.xlu0 %48
    %50 = vadd.xlane.f32.xlu0 %v47
    %v51 = vpop.xlane.xlu0 %50
    %v52 = vmul.f32 %v49, 0.03125
    %v53 = vmul.f32 %v51, 0.03125
    %v54 = vadd.f32 %v52, 1e-05
    %v55 = vadd.f32 %v53, 1e-05
    %v56 = vrsqrt.pop %v54
    %v57 = vrsqrt.pop %v55
    %v58 = vld [vmem:[%s1] sm:$0x1]
    %v60 = vlaneseq
    %v61 = vshrl.u32 %v60, 7
    %v62 = vsub.s32 0, %v61
    %v63 = vrot.slane %v58, %v62
    %v65 = vmul.f32 %v56, %v63
    %v66 = vmul.f32 %v57, %v63
    %v67 = vmul.f32 %v44, %v65
    %v68 = vmul.f32 %v45, %v66
    %v69 = vld [vmem:[%s2] sm:$0x1]
    %v71 = vlaneseq
    %v72 = vshrl.u32 %v71, 7
    %v73 = vsub.s32 0, %v72
    %v74 = vrot.slane %v69, %v73
    %v76 = vadd.f32 %v67, %v74
    %v77 = vadd.f32 %v68, %v74
    %78 = vst [vmem:[#allocation5] sm:$0xff] %v76
    %79 = vst [vmem:[#allocation5 + $0x8] sm:$0xff] %v77
    // Predicated region
    $region18: #{tpu_custom_call.1} parent=1 // pred_check
      _
    $region19: #{tpu_custom_call.1} parent=1 // pred_check_branch
      %81 = sbr.rel (0) target = $region21
    $region20: #{tpu_custom_call.1} parent=1 // pred_region
      %s83 = ssub.s32 256, 256
      %84 = vsyncadd [#allocation4], %s83
      %s85 = sshll.u32 [#allocation5], 4
      %s86 = int_to_ptr.vmem [resolvable:$true] %s85
      %91 = dma.vmem_to_hbm [thread:$0]  %s86, 256, %s3, [#allocation4], 128, 128, 8
    $region21: #{tpu_custom_call.1} parent=1 // pred_fallthru
      _
    // Predicated region
    $region22: #{tpu_custom_call.1} parent=1 // pred_check
      _
    $region23: #{tpu_custom_call.1} parent=1 // pred_check_branch
      %93 = sbr.rel (0) target = $region25
    $region24: #{tpu_custom_call.1} parent=1 // pred_region
      %94 = dma.done [#allocation4], 256
    $region25: #{tpu_custom_call.1} parent=1 // pred_fallthru
      _
    %95 = vsyncpa [#allocation3], 1
    %96 = vsyncpa [#allocation4], 1

</llo_original>
